<compile_context>
chip_gen: v7x
topology: tpu7x:2x2x1
jax: 0.10.0
libtpu: 0.0.40
codegen_flags: <defaults>
</compile_context>

<pallas_src>
import functools

import jax
import jax.numpy as jnp
from jax.experimental import pallas as pl
from jax.experimental.pallas import tpu as pltpu

LN_EPS = 1e-5
LANE = 128
DEFAULT_BLOCK_ROWS = 8192            # original rows per grid step (2048 packed rows at d=32)
VMEM_LIMIT_BYTES = 32 * 1024 * 1024  # >= v5e's 16 MiB scoped default, safe on v7x (64 MiB phys)


def _round_up(x, n):
    return ((x + n - 1) // n) * n


def _cdiv(a, b):
    return (a + b - 1) // b


def _transformer_block_kernel(x_ref, w1_ref, b1_ref, w2_ref, b2_ref,
                              g_ref, beta_ref, avg_ref, o_ref, *, matmul_dtype):
    # x: (TM, dp)   w1: (dp, hp)   b1: (1, hp)   w2: (hp, dp)
    # b2/g/beta: (1, dp)   avg: (dp, dp) block-diag segment-averaging matrix
    x = x_ref[...].astype(jnp.float32)

    # hypotheses_net: Linear -> ReLU -> Linear (block-diagonal packed, MXU, f32 accumulation)
    h = jnp.dot(x.astype(matmul_dtype), w1_ref[...],
                preferred_element_type=jnp.float32) + b1_ref[...]
    h = jnp.maximum(h, 0.0)
    a = jnp.dot(h.astype(matmul_dtype), w2_ref[...],
                preferred_element_type=jnp.float32) + b2_ref[...]

    # residual with pre-MLP x
    y = a + x

    # LayerNorm over each d-wide lane segment (biased variance, eps=1e-5, affine).
    # Segment mean / variance via a block-diagonal averaging matmul (stays 128-lane dense;
    # MXU has slack).  Always f32 for LN accuracy.
    avg = avg_ref[...]
    mean = jnp.dot(y, avg, preferred_element_type=jnp.float32)
    cen = y - mean
    var = jnp.dot(cen * cen, avg, preferred_element_type=jnp.float32)
    norm = cen * jax.lax.rsqrt(var + LN_EPS)
    o_ref[...] = (norm * g_ref[...] + beta_ref[...]).astype(o_ref.dtype)


def transformer_block(x, w1, b1, w2, b2, gamma, beta, *,
                      block_rows=DEFAULT_BLOCK_ROWS, matmul_dtype=jnp.float32):
    """x: (..., n_input). Weights must be in (in, out) layout: w1 (d, h), w2 (h, d)."""
    orig_shape = x.shape
    d = orig_shape[-1]

    # Guard against raw PyTorch (out, in) weights being passed in silently.
    if w1.ndim != 2 or w2.ndim != 2 or w1.shape[0] != d or w2.shape[1] != d \
            or w2.shape[0] != w1.shape[1]:
        raise ValueError("weights must be (in, out): w1 (d, h), w2 (h, d) with d = x.shape[-1]")
    h = w1.shape[1]

    x2 = x.reshape(-1, d)
    m = x2.shape[0]

    # Lane-dense packing factor: pack p feature-rows into one 128-wide lane row when possible.
    p = LANE // d if (d < LANE and LANE % d == 0) else 1
    dp, hp = d * p, h * p

    mp = _cdiv(m, p)                         # packed rows needed
    tm = min(max(block_rows // p, 8), _round_up(mp, 8))
    tm = _round_up(tm, 8)
    mp_pad = _round_up(mp, tm)
    m_pad = mp_pad * p

    if m_pad != m:
        # Padded rows produce a finite constant output (var=0 -> rsqrt(eps)); sliced off below.
        x2 = jnp.pad(x2, ((0, m_pad - m), (0, 0)))
    x2p = x2.reshape(mp_pad, dp)             # free row-major view: (M, d) -> (M/p, p*d)

    # Block-diagonal packed parameters (wrapper-side, tiny).
    eye = jnp.eye(p, dtype=jnp.float32)
    w1_bd = jnp.kron(eye, w1.astype(jnp.float32)).astype(matmul_dtype)      # (dp, hp)
    w2_bd = jnp.kron(eye, w2.astype(jnp.float32)).astype(matmul_dtype)      # (hp, dp)
    b1_t = jnp.tile(b1.reshape(1, h).astype(jnp.float32), (1, p))           # (1, hp)
    b2_t = jnp.tile(b2.reshape(1, d).astype(jnp.float32), (1, p))           # (1, dp)
    g_t = jnp.tile(gamma.reshape(1, d).astype(jnp.float32), (1, p))         # (1, dp)
    beta_t = jnp.tile(beta.reshape(1, d).astype(jnp.float32), (1, p))       # (1, dp)
    avg = jnp.kron(eye, jnp.full((d, d), 1.0 / d, dtype=jnp.float32))       # (dp, dp)

    grid = (mp_pad // tm,)

    act_bytes = jnp.dtype(x.dtype).itemsize
    w_bytes = jnp.dtype(matmul_dtype).itemsize
    cost = pl.CostEstimate(
        flops=4 * mp_pad * dp * hp + 4 * mp_pad * dp * dp,   # MLP + LN averaging matmuls
        transcendentals=mp_pad * p,                          # one rsqrt per original row
        bytes_accessed=2 * mp_pad * dp * act_bytes           # x in + out
        + 2 * dp * hp * w_bytes + (dp * dp + hp + 3 * dp) * 4,  # resident params (fetched once)
    )

    kernel = functools.partial(_transformer_block_kernel, matmul_dtype=matmul_dtype)

    out = pl.pallas_call(
        kernel,
        out_shape=jax.ShapeDtypeStruct((mp_pad, dp), x.dtype),
        grid_spec=pltpu.PrefetchScalarGridSpec(
            num_scalar_prefetch=0,
            grid=grid,
            in_specs=[
                pl.BlockSpec((tm, dp), lambda i: (i, 0)),    # x      : streamed row tiles
                pl.BlockSpec((dp, hp), lambda i: (0, 0)),    # w1_bd  : VMEM-resident
                pl.BlockSpec((1, hp), lambda i: (0, 0)),     # b1     : VMEM-resident
                pl.BlockSpec((hp, dp), lambda i: (0, 0)),    # w2_bd  : VMEM-resident
                pl.BlockSpec((1, dp), lambda i: (0, 0)),     # b2     : VMEM-resident
                pl.BlockSpec((1, dp), lambda i: (0, 0)),     # gamma  : VMEM-resident
                pl.BlockSpec((1, dp), lambda i: (0, 0)),     # beta   : VMEM-resident
                pl.BlockSpec((dp, dp), lambda i: (0, 0)),    # avg    : VMEM-resident
            ],
            out_specs=pl.BlockSpec((tm, dp), lambda i: (i, 0)),
        ),
        compiler_params=pltpu.CompilerParams(
            dimension_semantics=("parallel",),
            vmem_limit_bytes=VMEM_LIMIT_BYTES,
        ),
        cost_estimate=cost,
    )(x2p, w1_bd, b1_t, w2_bd, b2_t, g_t, beta_t, avg)

    out = out.reshape(m_pad, d)
    if m_pad != m:
        out = out[:m]
    return out.reshape(orig_shape)


def reference(x, w1, b1, w2, b2, gamma, beta):
    h = jnp.maximum(x @ w1 + b1, 0.0)
    a = h @ w2 + b2
    y = a + x
    mean = jnp.mean(y, axis=-1, keepdims=True)
    var = jnp.mean((y - mean) ** 2, axis=-1, keepdims=True)
    return (y - mean) / jnp.sqrt(var + LN_EPS) * gamma + beta


if __name__ == "__main__":
    # Module config: n_input=32, n_hypotheses=4 -> hidden = 128
    n_input, n_hypotheses = 32, 4
    hidden = n_input * n_hypotheses
    batch, seq = 2, 8

    key = jax.random.PRNGKey(0)
    kx, k1, kb1, k2, kb2, kx2 = jax.random.split(key, 6)

    x = jax.random.normal(kx, (batch, seq, n_input), dtype=jnp.float32)

    # Deterministic parameter init (uniform like PyTorch's default Linear init scale),
    # stored pre-transposed in (in, out) layout.
    s1 = 1.0 / jnp.sqrt(n_input)
    s2 = 1.0 / jnp.sqrt(hidden)
    w1 = jax.random.uniform(k1, (n_input, hidden), jnp.float32, -s1, s1)
    b1 = jax.random.uniform(kb1, (1, hidden), jnp.float32, -s1, s1)
    w2 = jax.random.uniform(k2, (hidden, n_input), jnp.float32, -s2, s2)
    b2 = jax.random.uniform(kb2, (1, n_input), jnp.float32, -s2, s2)
    gamma = jnp.ones((1, n_input), jnp.float32)   # nn.LayerNorm default weight
    beta = jnp.zeros((1, n_input), jnp.float32)   # nn.LayerNorm default bias

    ref = reference(x.reshape(-1, n_input), w1, b1, w2, b2, gamma, beta).reshape(x.shape)

    # 1) Default path (single grid step at this tiny size), exact f32 MXU math.
    out = transformer_block(x, w1, b1, w2, b2, gamma, beta)
    out = jax.block_until_ready(out)
    assert out.shape == x.shape
    assert jnp.allclose(out, ref, atol=1e-5, rtol=1e-5), "mismatch vs reference (default)"

    # 2) Larger input + small row tile to exercise the multi-step streamed pipeline path.
    x_big = jax.random.normal(kx2, (4, 48, n_input), dtype=jnp.float32)
    ref_big = reference(x_big.reshape(-1, n_input), w1, b1, w2, b2,
                        gamma, beta).reshape(x_big.shape)
    out_big = transformer_block(x_big, w1, b1, w2, b2, gamma, beta, block_rows=64)
    out_big = jax.block_until_ready(out_big)
    assert jnp.allclose(out_big, ref_big, atol=1e-5, rtol=1e-5), "mismatch vs reference (tiled)"

    # 3) bf16 MXU operand path (v6e feedback); LN / accumulation / activations stay f32.
    out_bf16 = transformer_block(x, w1, b1, w2, b2, gamma, beta, matmul_dtype=jnp.bfloat16)
    out_bf16 = jax.block_until_ready(out_bf16)
    assert jnp.allclose(out_bf16, ref, atol=5e-2, rtol=5e-2), "mismatch vs reference (bf16 MXU)"

    print("KERNEL_OK")
</pallas_src>

<mosaic_0001>
module attributes {stable_mosaic.version = 11 : i64} {
  func.func @_transformer_block_kernel(%arg0: i32, %arg1: memref<8x128xf32, #tpu.memory_space<vmem>>, %arg2: memref<128x512xf32, #tpu.memory_space<vmem>>, %arg3: memref<1x512xf32, #tpu.memory_space<vmem>>, %arg4: memref<512x128xf32, #tpu.memory_space<vmem>>, %arg5: memref<1x128xf32, #tpu.memory_space<vmem>>, %arg6: memref<1x128xf32, #tpu.memory_space<vmem>>, %arg7: memref<1x128xf32, #tpu.memory_space<vmem>>, %arg8: memref<128x128xf32, #tpu.memory_space<vmem>>, %arg9: memref<8x128xf32, #tpu.memory_space<vmem>>) attributes {dimension_semantics = [#tpu.dimension_semantics<parallel>], iteration_bounds = array<i64: 1>, scalar_prefetch = 0 : i64, scratch_operands = 0 : i64, tpu.core_type = #tpu.core_type<tc>, window_params = [{transform_indices = @transform_0, window_bounds = array<i64: 8, 128>}, {pipeline_mode = #tpu.pipeline_mode<synchronous>, transform_indices = @transform_1, window_bounds = array<i64: 128, 512>}, {pipeline_mode = #tpu.pipeline_mode<synchronous>, transform_indices = @transform_2, window_bounds = array<i64: 1, 512>}, {pipeline_mode = #tpu.pipeline_mode<synchronous>, transform_indices = @transform_3, window_bounds = array<i64: 512, 128>}, {pipeline_mode = #tpu.pipeline_mode<synchronous>, transform_indices = @transform_4, window_bounds = array<i64: 1, 128>}, {pipeline_mode = #tpu.pipeline_mode<synchronous>, transform_indices = @transform_5, window_bounds = array<i64: 1, 128>}, {pipeline_mode = #tpu.pipeline_mode<synchronous>, transform_indices = @transform_6, window_bounds = array<i64: 1, 128>}, {pipeline_mode = #tpu.pipeline_mode<synchronous>, transform_indices = @transform_7, window_bounds = array<i64: 128, 128>}, {transform_indices = @transform_8, window_bounds = array<i64: 8, 128>}]} {
    %c0 = arith.constant 0 : index
    %c0_0 = arith.constant 0 : index
    %0 = vector.load %arg1[%c0, %c0_0] : memref<8x128xf32, #tpu.memory_space<vmem>>, vector<8x128xf32>
    %c0_1 = arith.constant 0 : index
    %c0_2 = arith.constant 0 : index
    %1 = vector.load %arg2[%c0_1, %c0_2] : memref<128x512xf32, #tpu.memory_space<vmem>>, vector<128x512xf32>
    %cst = arith.constant dense<0.000000e+00> : vector<8x512xf32>
    %2 = tpu.matmul %0, %1, %cst {dimension_numbers = #tpu.dot_dimension_numbers<[1], [0], [0], [1], [0, 0, 1, 1], [], []>} : vector<8x128xf32>, vector<128x512xf32>, vector<8x512xf32> -> vector<8x512xf32>
    %c0_3 = arith.constant 0 : index
    %c0_4 = arith.constant 0 : index
    %3 = vector.load %arg3[%c0_3, %c0_4] : memref<1x512xf32, #tpu.memory_space<vmem>>, vector<1x512xf32>
    %4 = vector.broadcast %3 : vector<1x512xf32> to vector<8x512xf32>
    %5 = arith.addf %2, %4 : vector<8x512xf32>
    %cst_5 = arith.constant 0.000000e+00 : f32
    %6 = vector.broadcast %cst_5 : f32 to vector<8x512xf32>
    %7 = arith.maximumf %5, %6 : vector<8x512xf32>
    %c0_6 = arith.constant 0 : index
    %c0_7 = arith.constant 0 : index
    %8 = vector.load %arg4[%c0_6, %c0_7] : memref<512x128xf32, #tpu.memory_space<vmem>>, vector<512x128xf32>
    %cst_8 = arith.constant dense<0.000000e+00> : vector<8x128xf32>
    %9 = tpu.matmul %7, %8, %cst_8 {dimension_numbers = #tpu.dot_dimension_numbers<[1], [0], [0], [1], [0, 0, 1, 1], [], []>} : vector<8x512xf32>, vector<512x128xf32>, vector<8x128xf32> -> vector<8x128xf32>
    %c0_9 = arith.constant 0 : index
    %c0_10 = arith.constant 0 : index
    %10 = vector.load %arg5[%c0_9, %c0_10] : memref<1x128xf32, #tpu.memory_space<vmem>>, vector<1x128xf32>
    %11 = vector.broadcast %10 : vector<1x128xf32> to vector<8x128xf32>
    %12 = arith.addf %9, %11 : vector<8x128xf32>
    %13 = arith.addf %12, %0 : vector<8x128xf32>
    %c0_11 = arith.constant 0 : index
    %c0_12 = arith.constant 0 : index
    %14 = vector.load %arg8[%c0_11, %c0_12] : memref<128x128xf32, #tpu.memory_space<vmem>>, vector<128x128xf32>
    %cst_13 = arith.constant dense<0.000000e+00> : vector<8x128xf32>
    %15 = tpu.matmul %13, %14, %cst_13 {dimension_numbers = #tpu.dot_dimension_numbers<[1], [0], [0], [1], [0, 0, 1, 1], [], []>} : vector<8x128xf32>, vector<128x128xf32>, vector<8x128xf32> -> vector<8x128xf32>
    %16 = arith.subf %13, %15 : vector<8x128xf32>
    %17 = arith.mulf %16, %16 : vector<8x128xf32>
    %cst_14 = arith.constant dense<0.000000e+00> : vector<8x128xf32>
    %18 = tpu.matmul %17, %14, %cst_14 {dimension_numbers = #tpu.dot_dimension_numbers<[1], [0], [0], [1], [0, 0, 1, 1], [], []>} : vector<8x128xf32>, vector<128x128xf32>, vector<8x128xf32> -> vector<8x128xf32>
    %cst_15 = arith.constant 9.99999974E-6 : f32
    %19 = vector.broadcast %cst_15 : f32 to vector<8x128xf32>
    %20 = arith.addf %18, %19 : vector<8x128xf32>
    %21 = math.rsqrt %20 : vector<8x128xf32>
    %22 = arith.mulf %16, %21 : vector<8x128xf32>
    %c0_16 = arith.constant 0 : index
    %c0_17 = arith.constant 0 : index
    %23 = vector.load %arg6[%c0_16, %c0_17] : memref<1x128xf32, #tpu.memory_space<vmem>>, vector<1x128xf32>
    %24 = vector.broadcast %23 : vector<1x128xf32> to vector<8x128xf32>
    %25 = arith.mulf %22, %24 : vector<8x128xf32>
    %c0_18 = arith.constant 0 : index
    %c0_19 = arith.constant 0 : index
    %26 = vector.load %arg7[%c0_18, %c0_19] : memref<1x128xf32, #tpu.memory_space<vmem>>, vector<1x128xf32>
    %27 = vector.broadcast %26 : vector<1x128xf32> to vector<8x128xf32>
    %28 = arith.addf %25, %27 : vector<8x128xf32>
    %c0_20 = arith.constant 0 : index
    %c0_21 = arith.constant 0 : index
    %29 = vector.load %arg9[%c0_20, %c0_21] : memref<8x128xf32, #tpu.memory_space<vmem>>, vector<8x128xf32>
    tpu.vector_store %arg9[%c0_20, %c0_21], %28 {strides = array<i32>} : memref<8x128xf32, #tpu.memory_space<vmem>>, vector<8x128xf32>,
    return
  }
  func.func @transform_0(%arg0: i32) -> (i32, i32) {
    %c0_i32 = arith.constant 0 : i32
    %c0_i32_0 = arith.constant 0 : i32
    return %arg0, %c0_i32 : i32, i32
  }
  func.func @transform_1(%arg0: i32) -> (i32, i32) {
    %c0_i32 = arith.constant 0 : i32
    %c0_i32_0 = arith.constant 0 : i32
    %c0_i32_1 = arith.constant 0 : i32
    return %c0_i32, %c0_i32_0 : i32, i32
  }
  func.func @transform_2(%arg0: i32) -> (i32, i32) {
    %c0_i32 = arith.constant 0 : i32
    %c0_i32_0 = arith.constant 0 : i32
    %c0_i32_1 = arith.constant 0 : i32
    return %c0_i32, %c0_i32_0 : i32, i32
  }
  func.func @transform_3(%arg0: i32) -> (i32, i32) {
    %c0_i32 = arith.constant 0 : i32
    %c0_i32_0 = arith.constant 0 : i32
    %c0_i32_1 = arith.constant 0 : i32
    return %c0_i32, %c0_i32_0 : i32, i32
  }
  func.func @transform_4(%arg0: i32) -> (i32, i32) {
    %c0_i32 = arith.constant 0 : i32
    %c0_i32_0 = arith.constant 0 : i32
    %c0_i32_1 = arith.constant 0 : i32
    return %c0_i32, %c0_i32_0 : i32, i32
  }
  func.func @transform_5(%arg0: i32) -> (i32, i32) {
    %c0_i32 = arith.constant 0 : i32
    %c0_i32_0 = arith.constant 0 : i32
    %c0_i32_1 = arith.constant 0 : i32
    return %c0_i32, %c0_i32_0 : i32, i32
  }
  func.func @transform_6(%arg0: i32) -> (i32, i32) {
    %c0_i32 = arith.constant 0 : i32
    %c0_i32_0 = arith.constant 0 : i32
    %c0_i32_1 = arith.constant 0 : i32
    return %c0_i32, %c0_i32_0 : i32, i32
  }
  func.func @transform_7(%arg0: i32) -> (i32, i32) {
    %c0_i32 = arith.constant 0 : i32
    %c0_i32_0 = arith.constant 0 : i32
    %c0_i32_1 = arith.constant 0 : i32
    return %c0_i32, %c0_i32_0 : i32, i32
  }
  func.func @transform_8(%arg0: i32) -> (i32, i32) {
    %c0_i32 = arith.constant 0 : i32
    %c0_i32_0 = arith.constant 0 : i32
    return %arg0, %c0_i32 : i32, i32
  }
}

</mosaic_0001>

<llo_original>
// kernel: tpu_custom_call.1
$region0: #{tpu_custom_call.1}
  #allocation0 [shape = 'u32[]', space=smem, size = 0x4, offset = 0x4, fixed_abs, tag = 'smem constant byte address 0x4 - core index']
  #allocation1 [shape = 'u32[144,128]{1,0:T(1,128)}', space=vmem, size = 0x12000, scoped, tag = 'internal scratch']
  %s0 = inlined_call_operand.hbm [shape: f32[8,128], index: 0, kind: input, shape index: {}]
  %s1 = inlined_call_operand.hbm [shape: f32[128,512], index: 1, kind: input, shape index: {}]
  %s2 = inlined_call_operand.vmem [shape: f32[1,512], index: 2, kind: input, shape index: {}]
  %s3 = inlined_call_operand.hbm [shape: f32[512,128], index: 3, kind: input, shape index: {}]
  %s4 = inlined_call_operand.vmem [shape: f32[1,128], index: 4, kind: input, shape index: {}]
  %s5 = inlined_call_operand.vmem [shape: f32[1,128], index: 5, kind: input, shape index: {}]
  %s6 = inlined_call_operand.vmem [shape: f32[1,128], index: 6, kind: input, shape index: {}]
  %s7 = inlined_call_operand.hbm [shape: f32[128,128], index: 7, kind: input, shape index: {}]
  %s8 = inlined_call_operand.hbm [shape: f32[8,128], index: 8, kind: output, shape index: {}]
  %s9 = sld [smem:[#allocation0]]
  $region58: #{tpu_custom_call.1} parent=0
    _
  %s11 = ssub.s32 1, %s9
  %s12 = scalar_select 0, %s11, %s9
  $region1: #{tpu_custom_call.1} parent=0
    #allocation2 [shape = 'u8[4096]{0}', space=vmem, size = 0x1000, scoped, tag = 'input window, operand 0, single buffered']
    #allocation3 [shape = 's32[1]{0}', space=sflag, size = 0x4, scoped, tag = 'scoped memory for tpu_custom_call.1']
    #allocation4 [shape = 's32[1]{0}', space=sflag, size = 0x4, scoped, tag = 'scoped memory for tpu_custom_call.1']
    #allocation5 [shape = 'u8[262144]{0}', space=vmem, size = 0x40000, scoped, tag = 'input window, operand 1, single buffered']
    #allocation6 [shape = 's32[1]{0}', space=sflag, size = 0x4, scoped, tag = 'scoped memory for tpu_custom_call.1']
    #allocation7 [shape = 'u8[262144]{0}', space=vmem, size = 0x40000, scoped, tag = 'input window, operand 3, single buffered']
    #allocation8 [shape = 'u8[65536]{0}', space=vmem, size = 0x10000, scoped, tag = 'input window, operand 7, single buffered']
    #allocation9 [shape = 's32[1]{0}', space=sflag, size = 0x4, scoped, tag = 'scoped memory for tpu_custom_call.1']
    #allocation10 [shape = 'u8[4096]{0}', space=vmem, size = 0x1000, scoped, tag = 'output window, operand 0, single buffered']
    %13 = vsyncpa [#allocation3], 0
    %14 = vsyncpa [#allocation6], 0
    %15 = vsyncpa [#allocation9], 0
    %16 = vsyncpa [#allocation4], 0
    // Predicated region
    $region2: #{tpu_custom_call.1} parent=1 // pred_check
      _
    $region3: #{tpu_custom_call.1} parent=1 // pred_check_branch
      %18 = sbr.rel (0) target = $region5
    $region4: #{tpu_custom_call.1} parent=1 // pred_region
      %s20 = ssub.s32 128, 128
      %21 = vsyncadd [#allocation3], %s20
      %s23 = sshll.u32 [#allocation2], 4
      %s24 = int_to_ptr.vmem [resolvable:$true] %s23
      %26 = dma.hbm_to_vmem [thread:$0]  %s0, 128, %s24, [#allocation3]
    $region5: #{tpu_custom_call.1} parent=1 // pred_fallthru
      _
    // Predicated region
    $region6: #{tpu_custom_call.1} parent=1 // pred_check
      _
    $region7: #{tpu_custom_call.1} parent=1 // pred_check_branch
      %28 = sbr.rel (0) target = $region9
    $region8: #{tpu_custom_call.1} parent=1 // pred_region
      %s30 = ssub.s32 8192, 8192
      %31 = vsyncadd [#allocation6], %s30
      %s32 = sshll.u32 [#allocation5], 4
      %s33 = int_to_ptr.vmem [resolvable:$true] %s32
      %38 = dma.hbm_to_vmem [thread:$0]  %s1, 8192, %s33, [#allocation6], 512, 512, 32
    $region9: #{tpu_custom_call.1} parent=1 // pred_fallthru
      _
    // Predicated region
    $region10: #{tpu_custom_call.1} parent=1 // pred_check
      _
    $region11: #{tpu_custom_call.1} parent=1 // pred_check_branch
      %40 = sbr.rel (0) target = $region13
    $region12: #{tpu_custom_call.1} parent=1 // pred_region
      _
    $region13: #{tpu_custom_call.1} parent=1 // pred_fallthru
      _
    // Predicated region
    $region14: #{tpu_custom_call.1} parent=1 // pred_check
      _
    $region15: #{tpu_custom_call.1} parent=1 // pred_check_branch
      %42 = sbr.rel (0) target = $region17
    $region16: #{tpu_custom_call.1} parent=1 // pred_region
      %s44 = ssub.s32 8192, 8192
      %45 = vsyncadd [#allocation6], %s44
      %s46 = sshll.u32 [#allocation7], 4
      %s47 = int_to_ptr.vmem [resolvable:$true] %s46
      %52 = dma.hbm_to_vmem [thread:$0]  %s3, 8192, %s47, [#allocation6], 128, 128, 8
    $region17: #{tpu_custom_call.1} parent=1 // pred_fallthru
      _
    // Predicated region
    $region18: #{tpu_custom_call.1} parent=1 // pred_check
      _
    $region19: #{tpu_custom_call.1} parent=1 // pred_check_branch
      %54 = sbr.rel (0) target = $region21
    $region20: #{tpu_custom_call.1} parent=1 // pred_region
      _
    $region21: #{tpu_custom_call.1} parent=1 // pred_fallthru
      _
    // Predicated region
    $region22: #{tpu_custom_call.1} parent=1 // pred_check
      _
    $region23: #{tpu_custom_call.1} parent=1 // pred_check_branch
      %56 = sbr.rel (0) target = $region25
    $region24: #{tpu_custom_call.1} parent=1 // pred_region
      _
    $region25: #{tpu_custom_call.1} parent=1 // pred_fallthru
      _
    // Predicated region
    $region26: #{tpu_custom_call.1} parent=1 // pred_check
      _
    $region27: #{tpu_custom_call.1} parent=1 // pred_check_branch
      %58 = sbr.rel (0) target = $region29
    $region28: #{tpu_custom_call.1} parent=1 // pred_region
      _
    $region29: #{tpu_custom_call.1} parent=1 // pred_fallthru
      _
    // Predicated region
    $region30: #{tpu_custom_call.1} parent=1 // pred_check
      _
    $region31: #{tpu_custom_call.1} parent=1 // pred_check_branch
      %60 = sbr.rel (0) target = $region33
    $region32: #{tpu_custom_call.1} parent=1 // pred_region
      %s62 = ssub.s32 2048, 2048
      %63 = vsyncadd [#allocation9], %s62
      %s64 = sshll.u32 [#allocation8], 4
      %s65 = int_to_ptr.vmem [resolvable:$true] %s64
      %70 = dma.hbm_to_vmem [thread:$0]  %s7, 2048, %s65, [#allocation9], 128, 128, 8
    $region33: #{tpu_custom_call.1} parent=1 // pred_fallthru
      _
    // Predicated region
    $region34: #{tpu_custom_call.1} parent=1 // pred_check
      _
    $region35: #{tpu_custom_call.1} parent=1 // pred_check_branch
      %72 = sbr.rel (0) target = $region37
    $region36: #{tpu_custom_call.1} parent=1 // pred_region
      %73 = dma.done [#allocation3], 128
    $region37: #{tpu_custom_call.1} parent=1 // pred_fallthru
      _
    // Predicated region
    $region38: #{tpu_custom_call.1} parent=1 // pred_check
      _
    $region39: #{tpu_custom_call.1} parent=1 // pred_check_branch
      %75 = sbr.rel (0) target = $region41
    $region40: #{tpu_custom_call.1} parent=1 // pred_region
      %76 = dma.done [#allocation6], 8192
    $region41: #{tpu_custom_call.1} parent=1 // pred_fallthru
      _
    // Predicated region
    $region42: #{tpu_custom_call.1} parent=1 // pred_check
      _
    $region43: #{tpu_custom_call.1} parent=1 // pred_check_branch
      %78 = sbr.rel (0) target = $region45
    $region44: #{tpu_custom_call.1} parent=1 // pred_region
      %79 = dma.done [#allocation6], 8192
    $region45: #{tpu_custom_call.1} parent=1 // pred_fallthru
      _
    // Predicated region
    $region46: #{tpu_custom_call.1} parent=1 // pred_check
      _
    $region47: #{tpu_custom_call.1} parent=1 // pred_check_branch
      %81 = sbr.rel (0) target = $region49
    $region48: #{tpu_custom_call.1} parent=1 // pred_region
      %82 = dma.done [#allocation9], 2048
    $region49: #{tpu_custom_call.1} parent=1 // pred_fallthru
      _
    %v83 = vld [vmem:[#allocation2] sm:$0xff]
    %v84 = vld [vmem:[#allocation5] sm:$0xff]
    %v85 = vld [vmem:[#allocation5 + $0x8] sm:$0xff]
    %v86 = vld [vmem:[#allocation5 + $0x10] sm:$0xff]
    %v87 = vld [vmem:[#allocation5 + $0x18] sm:$0xff]
    %v88 = vld [vmem:[#allocation5 + $0x20] sm:$0xff]
    %v89 = vld [vmem:[#allocation5 + $0x28] sm:$0xff]
    %v90 = vld [vmem:[#allocation5 + $0x30] sm:$0xff]
    %v91 = vld [vmem:[#allocation5 + $0x38] sm:$0xff]
    %v92 = vld [vmem:[#allocation5 + $0x40] sm:$0xff]
    %v93 = vld [vmem:[#allocation5 + $0x48] sm:$0xff]
    %v94 = vld [vmem:[#allocation5 + $0x50] sm:$0xff]
    %v95 = vld [vmem:[#allocation5 + $0x58] sm:$0xff]
    %v96 = vld [vmem:[#allocation5 + $0x60] sm:$0xff]
    %v97 = vld [vmem:[#allocation5 + $0x68] sm:$0xff]
    %v98 = vld [vmem:[#allocation5 + $0x70] sm:$0xff]
    %v99 = vld [vmem:[#allocation5 + $0x78] sm:$0xff]
    %v100 = vld [vmem:[#allocation5 + $0x80] sm:$0xff]
    %v101 = vld [vmem:[#allocation5 + $0x88] sm:$0xff]
    %v102 = vld [vmem:[#allocation5 + $0x90] sm:$0xff]
    %v103 = vld [vmem:[#allocation5 + $0x98] sm:$0xff]
    %v104 = vld [vmem:[#allocation5 + $0xa0] sm:$0xff]
    %v105 = vld [vmem:[#allocation5 + $0xa8] sm:$0xff]
    %v106 = vld [vmem:[#allocation5 + $0xb0] sm:$0xff]
    %v107 = vld [vmem:[#allocation5 + $0xb8] sm:$0xff]
    %v108 = vld [vmem:[#allocation5 + $0xc0] sm:$0xff]
    %v109 = vld [vmem:[#allocation5 + $0xc8] sm:$0xff]
    %v110 = vld [vmem:[#allocation5 + $0xd0] sm:$0xff]
    %v111 = vld [vmem:[#allocation5 + $0xd8] sm:$0xff]
    %v112 = vld [vmem:[#allocation5 + $0xe0] sm:$0xff]
    %v113 = vld [vmem:[#allocation5 + $0xe8] sm:$0xff]
    %v114 = vld [vmem:[#allocation5 + $0xf0] sm:$0xff]
    %v115 = vld [vmem:[#allocation5 + $0xf8] sm:$0xff]
    %v116 = vld [vmem:[#allocation5 + $0x100] sm:$0xff]
    %v117 = vld [vmem:[#allocation5 + $0x108] sm:$0xff]
    %v118 = vld [vmem:[#allocation5 + $0x110] sm:$0xff]
    %v119 = vld [vmem:[#allocation5 + $0x118] sm:$0xff]
    %v120 = vld [vmem:[#allocation5 + $0x120] sm:$0xff]
    %v121 = vld [vmem:[#allocation5 + $0x128] sm:$0xff]
    %v122 = vld [vmem:[#allocation5 + $0x130] sm:$0xff]
    %v123 = vld [vmem:[#allocation5 + $0x138] sm:$0xff]
    %v124 = vld [vmem:[#allocation5 + $0x140] sm:$0xff]
    %v125 = vld [vmem:[#allocation5 + $0x148] sm:$0xff]
    %v126 = vld [vmem:[#allocation5 + $0x150] sm:$0xff]
    %v127 = vld [vmem:[#allocation5 + $0x158] sm:$0xff]
    %v128 = vld [vmem:[#allocation5 + $0x160] sm:$0xff]
    %v129 = vld [vmem:[#allocation5 + $0x168] sm:$0xff]
    %v130 = vld [vmem:[#allocation5 + $0x170] sm:$0xff]
    %v131 = vld [vmem:[#allocation5 + $0x178] sm:$0xff]
    %v132 = vld [vmem:[#allocation5 + $0x180] sm:$0xff]
    %v133 = vld [vmem:[#allocation5 + $0x188] sm:$0xff]
    %v134 = vld [vmem:[#allocation5 + $0x190] sm:$0xff]
    %v135 = vld [vmem:[#allocation5 + $0x198] sm:$0xff]
    %v136 = vld [vmem:[#allocation5 + $0x1a0] sm:$0xff]
    %v137 = vld [vmem:[#allocation5 + $0x1a8] sm:$0xff]
    %v138 = vld [vmem:[#allocation5 + $0x1b0] sm:$0xff]
    %v139 = vld [vmem:[#allocation5 + $0x1b8] sm:$0xff]
    %v140 = vld [vmem:[#allocation5 + $0x1c0] sm:$0xff]
    %v141 = vld [vmem:[#allocation5 + $0x1c8] sm:$0xff]
    %v142 = vld [vmem:[#allocation5 + $0x1d0] sm:$0xff]
    %v143 = vld [vmem:[#allocation5 + $0x1d8] sm:$0xff]
    %v144 = vld [vmem:[#allocation5 + $0x1e0] sm:$0xff]
    %v145 = vld [vmem:[#allocation5 + $0x1e8] sm:$0xff]
    %v146 = vld [vmem:[#allocation5 + $0x1f0] sm:$0xff]
    %v147 = vld [vmem:[#allocation5 + $0x1f8] sm:$0xff]
    %v148 = vld [vmem:[%s2] sm:$0xf]
    %v150 = vlaneseq
    %v151 = vshrl.u32 %v150, 7
    %v152 = vsub.s32 0, %v151
    %v153 = vrot.slane %v148, %v152
    %v154 = vlaneseq
    %v155 = vshrl.u32 %v154, 7
    %v156 = vsub.s32 1, %v155
    %v157 = vrot.slane %v148, %v156
    %v158 = vlaneseq
    %v159 = vshrl.u32 %v158, 7
    %v160 = vsub.s32 2, %v159
    %v161 = vrot.slane %v148, %v160
    %v162 = vlaneseq
    %v163 = vshrl.u32 %v162, 7
    %v164 = vsub.s32 3, %v163
    %v165 = vrot.slane %v148, %v164
    %170 = vmatprep.subr.mxu0 %v85
    %171 = vmatpush1.msra.mxu0 %v84
    %172 = vmatprep.subr.mxu0 %v89
    %173 = vmatpush1.msra.mxu0 %v88
    %174 = vmatprep.subr.mxu0 %v93
    %175 = vmatpush1.msra.mxu0 %v92
    %176 = vmatprep.subr.mxu0 %v97
    %177 = vmatpush1.msra.mxu0 %v96
    %178 = vmatprep.subr.mxu0 %v101
    %179 = vmatpush1.msra.mxu0 %v100
    %180 = vmatprep.subr.mxu0 %v105
    %181 = vmatpush1.msra.mxu0 %v104
    %182 = vmatprep.subr.mxu0 %v109
    %183 = vmatpush1.msra.mxu0 %v108
    %184 = vmatprep.subr.mxu0 %v113
    %185 = vmatpush1.msra.mxu0 %v112
    %186 = vmatprep.subr.mxu0 %v117
    %187 = vmatpush1.msra.mxu0 %v116
    %188 = vmatprep.subr.mxu0 %v121
    %189 = vmatpush1.msra.mxu0 %v120
    %190 = vmatprep.subr.mxu0 %v125
    %191 = vmatpush1.msra.mxu0 %v124
    %192 = vmatprep.subr.mxu0 %v129
    %193 = vmatpush1.msra.mxu0 %v128
    %194 = vmatprep.subr.mxu0 %v133
    %195 = vmatpush1.msra.mxu0 %v132
    %196 = vmatprep.subr.mxu0 %v137
    %197 = vmatpush1.msra.mxu0 %v136
    %198 = vmatprep.subr.mxu0 %v141
    %199 = vmatpush1.msra.mxu0 %v140
    %200 = vmatprep.subr.mxu0 %v145
    %201 = vmatpush1.msra.mxu0 %v144
    %202 = vmatprep.subr.mxu0 0.0
    %203 = vmatpush1.msra.mxu0 0.0
    %204 = vmatprep.subr.mxu0 0.0
    %205 = vmatpush1.msra.mxu0 0.0
    %206 = vmatprep.subr.mxu0 0.0
    %207 = vmatpush1.msra.mxu0 0.0
    %208 = vmatprep.subr.mxu0 0.0
    %209 = vmatpush1.msra.mxu0 0.0
    %210 = vmatprep.subr.mxu0 0.0
    %211 = vmatpush1.msra.mxu0 0.0
    %212 = vmatprep.subr.mxu0 0.0
    %213 = vmatpush1.msra.mxu0 0.0
    %214 = vmatprep.subr.mxu0 0.0
    %215 = vmatpush1.msra.mxu0 0.0
    %216 = vmatprep.subr.mxu0 0.0
    %217 = vmatpush1.msra.mxu0 0.0
    %218 = vmatprep.subr.mxu0 0.0
    %219 = vmatpush1.msra.mxu0 0.0
    %220 = vmatprep.subr.mxu0 0.0
    %221 = vmatpush1.msra.mxu0 0.0
    %222 = vmatprep.subr.mxu0 0.0
    %223 = vmatpush1.msra.mxu0 0.0
    %224 = vmatprep.subr.mxu0 0.0
    %225 = vmatpush1.msra.mxu0 0.0
    %226 = vmatprep.subr.mxu0 0.0
    %227 = vmatpush1.msra.mxu0 0.0
    %228 = vmatprep.subr.mxu0 0.0
    %229 = vmatpush1.msra.mxu0 0.0
    %230 = vmatprep.subr.mxu0 0.0
    %231 = vmatpush1.msra.mxu0 0.0
    %232 = vmatprep.subr.mxu0 0.0
    %233 = vmatpush1.msra.mxu0 0.0
    %234 = vmatprep.mubr.f32.mxu0 0.0
    %235 = vmatmul.mubr.f32.gmra.mrb[0].mxu0 %v83
    %v236 = vpop.f32.mrb[0].mxu0
    %v237 = vadd.f32 %v153, %v236
    %v238 = vpop.f32.mrb[0].mxu0
    %v239 = vadd.f32 %v157, %v238
    %240 = vdwg.mxu0
    %241 = vmatprep.subr.mxu0 %v87
    %242 = vmatpush1.msra.mxu0 %v86
    %243 = vmatprep.subr.mxu0 %v91
    %244 = vmatpush1.msra.mxu0 %v90
    %245 = vmatprep.subr.mxu0 %v95
    %246 = vmatpush1.msra.mxu0 %v94
    %247 = vmatprep.subr.mxu0 %v99
    %248 = vmatpush1.msra.mxu0 %v98
    %249 = vmatprep.subr.mxu0 %v103
    %250 = vmatpush1.msra.mxu0 %v102
    %251 = vmatprep.subr.mxu0 %v107
    %252 = vmatpush1.msra.mxu0 %v106
    %253 = vmatprep.subr.mxu0 %v111
    %254 = vmatpush1.msra.mxu0 %v110
    %255 = vmatprep.subr.mxu0 %v115
    %256 = vmatpush1.msra.mxu0 %v114
    %257 = vmatprep.subr.mxu0 %v119
    %258 = vmatpush1.msra.mxu0 %v118
    %259 = vmatprep.subr.mxu0 %v123
    %260 = vmatpush1.msra.mxu0 %v122
    %261 = vmatprep.subr.mxu0 %v127
    %262 = vmatpush1.msra.mxu0 %v126
    %263 = vmatprep.subr.mxu0 %v131
    %264 = vmatpush1.msra.mxu0 %v130
    %265 = vmatprep.subr.mxu0 %v135
    %266 = vmatpush1.msra.mxu0 %v134
    %267 = vmatprep.subr.mxu0 %v139
    %268 = vmatpush1.msra.mxu0 %v138
    %269 = vmatprep.subr.mxu0 %v143
    %270 = vmatpush1.msra.mxu0 %v142
    %271 = vmatprep.subr.mxu0 %v147
    %272 = vmatpush1.msra.mxu0 %v146
    %273 = vmatprep.subr.mxu0 0.0
    %274 = vmatpush1.msra.mxu0 0.0
    %275 = vmatprep.subr.mxu0 0.0
    %276 = vmatpush1.msra.mxu0 0.0
    %277 = vmatprep.subr.mxu0 0.0
    %278 = vmatpush1.msra.mxu0 0.0
    %279 = vmatprep.subr.mxu0 0.0
    %280 = vmatpush1.msra.mxu0 0.0
    %281 = vmatprep.subr.mxu0 0.0
    %282 = vmatpush1.msra.mxu0 0.0
    %283 = vmatprep.subr.mxu0 0.0
    %284 = vmatpush1.msra.mxu0 0.0
    %285 = vmatprep.subr.mxu0 0.0
    %286 = vmatpush1.msra.mxu0 0.0
    %287 = vmatprep.subr.mxu0 0.0
    %288 = vmatpush1.msra.mxu0 0.0
    %289 = vmatprep.subr.mxu0 0.0
    %290 = vmatpush1.msra.mxu0 0.0
    %291 = vmatprep.subr.mxu0 0.0
    %292 = vmatpush1.msra.mxu0 0.0
    %293 = vmatprep.subr.mxu0 0.0
    %294 = vmatpush1.msra.mxu0 0.0
    %295 = vmatprep.subr.mxu0 0.0
    %296 = vmatpush1.msra.mxu0 0.0
    %297 = vmatprep.subr.mxu0 0.0
    %298 = vmatpush1.msra.mxu0 0.0
    %299 = vmatprep.subr.mxu0 0.0
    %300 = vmatpush1.msra.mxu0 0.0
    %301 = vmatprep.subr.mxu0 0.0
    %302 = vmatpush1.msra.mxu0 0.0
    %303 = vmatprep.subr.mxu0 0.0
    %304 = vmatpush1.msra.mxu0 0.0
    %305 = vmatprep.mubr.f32.mxu0 0.0
    %306 = vmatmul.mubr.f32.gmra.mrb[0].mxu0 %v83
    %v307 = vpop.f32.mrb[0].mxu0
    %v308 = vadd.f32 %v161, %v307
    %v309 = vpop.f32.mrb[0].mxu0
    %v310 = vadd.f32 %v165, %v309
    %311 = vdwg.mxu0
    %v312 = vmax.f32 %v237, 0.0
    %v313 = vmax.f32 %v239, 0.0
    %v314 = vmax.f32 %v308, 0.0
    %v315 = vmax.f32 %v310, 0.0
    %v316 = vld [vmem:[#allocation7] sm:$0xff]
    %v317 = vld [vmem:[#allocation7 + $0x8] sm:$0xff]
    %v318 = vld [vmem:[#allocation7 + $0x10] sm:$0xff]
    %v319 = vld [vmem:[#allocation7 + $0x18] sm:$0xff]
    %v320 = vld [vmem:[#allocation7 + $0x20] sm:$0xff]
    %v321 = vld [vmem:[#allocation7 + $0x28] sm:$0xff]
    %v322 = vld [vmem:[#allocation7 + $0x30] sm:$0xff]
    %v323 = vld [vmem:[#allocation7 + $0x38] sm:$0xff]
    %v324 = vld [vmem:[#allocation7 + $0x40] sm:$0xff]
    %v325 = vld [vmem:[#allocation7 + $0x48] sm:$0xff]
    %v326 = vld [vmem:[#allocation7 + $0x50] sm:$0xff]
    %v327 = vld [vmem:[#allocation7 + $0x58] sm:$0xff]
    %v328 = vld [vmem:[#allocation7 + $0x60] sm:$0xff]
    %v329 = vld [vmem:[#allocation7 + $0x68] sm:$0xff]
    %v330 = vld [vmem:[#allocation7 + $0x70] sm:$0xff]
    %v331 = vld [vmem:[#allocation7 + $0x78] sm:$0xff]
    %v332 = vld [vmem:[#allocation7 + $0x80] sm:$0xff]
    %v333 = vld [vmem:[#allocation7 + $0x88] sm:$0xff]
    %v334 = vld [vmem:[#allocation7 + $0x90] sm:$0xff]
    %v335 = vld [vmem:[#allocation7 + $0x98] sm:$0xff]
    %v336 = vld [vmem:[#allocation7 + $0xa0] sm:$0xff]
    %v337 = vld [vmem:[#allocation7 + $0xa8] sm:$0xff]
    %v338 = vld [vmem:[#allocation7 + $0xb0] sm:$0xff]
    %v339 = vld [vmem:[#allocation7 + $0xb8] sm:$0xff]
    %v340 = vld [vmem:[#allocation7 + $0xc0] sm:$0xff]
    %v341 = vld [vmem:[#allocation7 + $0xc8] sm:$0xff]
    %v342 = vld [vmem:[#allocation7 + $0xd0] sm:$0xff]
    %v343 = vld [vmem:[#allocation7 + $0xd8] sm:$0xff]
    %v344 = vld [vmem:[#allocation7 + $0xe0] sm:$0xff]
    %v345 = vld [vmem:[#allocation7 + $0xe8] sm:$0xff]
    %v346 = vld [vmem:[#allocation7 + $0xf0] sm:$0xff]
    %v347 = vld [vmem:[#allocation7 + $0xf8] sm:$0xff]
    %v348 = vld [vmem:[#allocation7 + $0x100] sm:$0xff]
    %v349 = vld [vmem:[#allocation7 + $0x108] sm:$0xff]
    %v350 = vld [vmem:[#allocation7 + $0x110] sm:$0xff]
    %v351 = vld [vmem:[#allocation7 + $0x118] sm:$0xff]
    %v352 = vld [vmem:[#allocation7 + $0x120] sm:$0xff]
    %v353 = vld [vmem:[#allocation7 + $0x128] sm:$0xff]
    %v354 = vld [vmem:[#allocation7 + $0x130] sm:$0xff]
    %v355 = vld [vmem:[#allocation7 + $0x138] sm:$0xff]
    %v356 = vld [vmem:[#allocation7 + $0x140] sm:$0xff]
    %v357 = vld [vmem:[#allocation7 + $0x148] sm:$0xff]
    %v358 = vld [vmem:[#allocation7 + $0x150] sm:$0xff]
    %v359 = vld [vmem:[#allocation7 + $0x158] sm:$0xff]
    %v360 = vld [vmem:[#allocation7 + $0x160] sm:$0xff]
    %v361 = vld [vmem:[#allocation7 + $0x168] sm:$0xff]
    %v362 = vld [vmem:[#allocation7 + $0x170] sm:$0xff]
    %v363 = vld [vmem:[#allocation7 + $0x178] sm:$0xff]
    %v364 = vld [vmem:[#allocation7 + $0x180] sm:$0xff]
    %v365 = vld [vmem:[#allocation7 + $0x188] sm:$0xff]
    %v366 = vld [vmem:[#allocation7 + $0x190] sm:$0xff]
    %v367 = vld [vmem:[#allocation7 + $0x198] sm:$0xff]
    %v368 = vld [vmem:[#allocation7 + $0x1a0] sm:$0xff]
    %v369 = vld [vmem:[#allocation7 + $0x1a8] sm:$0xff]
    %v370 = vld [vmem:[#allocation7 + $0x1b0] sm:$0xff]
    %v371 = vld [vmem:[#allocation7 + $0x1b8] sm:$0xff]
    %v372 = vld [vmem:[#allocation7 + $0x1c0] sm:$0xff]
    %v373 = vld [vmem:[#allocation7 + $0x1c8] sm:$0xff]
    %v374 = vld [vmem:[#allocation7 + $0x1d0] sm:$0xff]
    %v375 = vld [vmem:[#allocation7 + $0x1d8] sm:$0xff]
    %v376 = vld [vmem:[#allocation7 + $0x1e0] sm:$0xff]
    %v377 = vld [vmem:[#allocation7 + $0x1e8] sm:$0xff]
    %v378 = vld [vmem:[#allocation7 + $0x1f0] sm:$0xff]
    %v379 = vld [vmem:[#allocation7 + $0x1f8] sm:$0xff]
    %v380 = vld [vmem:[%s4] sm:$0x1]
    %v382 = vlaneseq
    %v383 = vshrl.u32 %v382, 7
    %v384 = vsub.s32 0, %v383
    %v385 = vrot.slane %v380, %v384
    %387 = vmatprep.subr.mxu0 0.0
    %388 = vmatpush1.msra.mxu0 %v316
    %389 = vmatprep.subr.mxu0 0.0
    %390 = vmatpush1.msra.mxu0 %v317
    %391 = vmatprep.subr.mxu0 0.0
    %392 = vmatpush1.msra.mxu0 %v318
    %393 = vmatprep.subr.mxu0 0.0
    %394 = vmatpush1.msra.mxu0 %v319
    %395 = vmatprep.subr.mxu0 0.0
    %396 = vmatpush1.msra.mxu0 %v320
    %397 = vmatprep.subr.mxu0 0.0
    %398 = vmatpush1.msra.mxu0 %v321
    %399 = vmatprep.subr.mxu0 0.0
    %400 = vmatpush1.msra.mxu0 %v322
    %401 = vmatprep.subr.mxu0 0.0
    %402 = vmatpush1.msra.mxu0 %v323
    %403 = vmatprep.subr.mxu0 0.0
    %404 = vmatpush1.msra.mxu0 %v324
    %405 = vmatprep.subr.mxu0 0.0
    %406 = vmatpush1.msra.mxu0 %v325
    %407 = vmatprep.subr.mxu0 0.0
    %408 = vmatpush1.msra.mxu0 %v326
    %409 = vmatprep.subr.mxu0 0.0
    %410 = vmatpush1.msra.mxu0 %v327
    %411 = vmatprep.subr.mxu0 0.0
    %412 = vmatpush1.msra.mxu0 %v328
    %413 = vmatprep.subr.mxu0 0.0
    %414 = vmatpush1.msra.mxu0 %v329
    %415 = vmatprep.subr.mxu0 0.0
    %416 = vmatpush1.msra.mxu0 %v330
    %417 = vmatprep.subr.mxu0 0.0
    %418 = vmatpush1.msra.mxu0 %v331
    %419 = vmatprep.subr.mxu0 0.0
    %420 = vmatpush1.msra.mxu0 %v332
    %421 = vmatprep.subr.mxu0 0.0
    %422 = vmatpush1.msra.mxu0 %v333
    %423 = vmatprep.subr.mxu0 0.0
    %424 = vmatpush1.msra.mxu0 %v334
    %425 = vmatprep.subr.mxu0 0.0
    %426 = vmatpush1.msra.mxu0 %v335
    %427 = vmatprep.subr.mxu0 0.0
    %428 = vmatpush1.msra.mxu0 %v336
    %429 = vmatprep.subr.mxu0 0.0
    %430 = vmatpush1.msra.mxu0 %v337
    %431 = vmatprep.subr.mxu0 0.0
    %432 = vmatpush1.msra.mxu0 %v338
    %433 = vmatprep.subr.mxu0 0.0
    %434 = vmatpush1.msra.mxu0 %v339
    %435 = vmatprep.subr.mxu0 0.0
    %436 = vmatpush1.msra.mxu0 %v340
    %437 = vmatprep.subr.mxu0 0.0
    %438 = vmatpush1.msra.mxu0 %v341
    %439 = vmatprep.subr.mxu0 0.0
    %440 = vmatpush1.msra.mxu0 %v342
    %441 = vmatprep.subr.mxu0 0.0
    %442 = vmatpush1.msra.mxu0 %v343
    %443 = vmatprep.subr.mxu0 0.0
    %444 = vmatpush1.msra.mxu0 %v344
    %445 = vmatprep.subr.mxu0 0.0
    %446 = vmatpush1.msra.mxu0 %v345
    %447 = vmatprep.subr.mxu0 0.0
    %448 = vmatpush1.msra.mxu0 %v346
    %449 = vmatprep.subr.mxu0 0.0
    %450 = vmatpush1.msra.mxu0 %v347
    %451 = vmatprep.mubr.f32.mxu0 %v313
    %452 = vmatmul.mubr.f32.gmra.mrb[0].mxu0 %v312
    %v453 = vpop.f32.mrb[0].mxu0
    %v454 = vadd.f32 %v385, %v453
    %v455 = vpop.f32.mrb[0].mxu0
    %456 = vdwg.mxu0
    %457 = vmatprep.subr.mxu0 0.0
    %458 = vmatpush1.msra.mxu0 %v348
    %459 = vmatprep.subr.mxu0 0.0
    %460 = vmatpush1.msra.mxu0 %v349
    %461 = vmatprep.subr.mxu0 0.0
    %462 = vmatpush1.msra.mxu0 %v350
    %463 = vmatprep.subr.mxu0 0.0
    %464 = vmatpush1.msra.mxu0 %v351
    %465 = vmatprep.subr.mxu0 0.0
    %466 = vmatpush1.msra.mxu0 %v352
    %467 = vmatprep.subr.mxu0 0.0
    %468 = vmatpush1.msra.mxu0 %v353
    %469 = vmatprep.subr.mxu0 0.0
    %470 = vmatpush1.msra.mxu0 %v354
    %471 = vmatprep.subr.mxu0 0.0
    %472 = vmatpush1.msra.mxu0 %v355
    %473 = vmatprep.subr.mxu0 0.0
    %474 = vmatpush1.msra.mxu0 %v356
    %475 = vmatprep.subr.mxu0 0.0
    %476 = vmatpush1.msra.mxu0 %v357
    %477 = vmatprep.subr.mxu0 0.0
    %478 = vmatpush1.msra.mxu0 %v358
    %479 = vmatprep.subr.mxu0 0.0
    %480 = vmatpush1.msra.mxu0 %v359
    %481 = vmatprep.subr.mxu0 0.0
    %482 = vmatpush1.msra.mxu0 %v360
    %483 = vmatprep.subr.mxu0 0.0
    %484 = vmatpush1.msra.mxu0 %v361
    %485 = vmatprep.subr.mxu0 0.0
    %486 = vmatpush1.msra.mxu0 %v362
    %487 = vmatprep.subr.mxu0 0.0
    %488 = vmatpush1.msra.mxu0 %v363
    %489 = vmatprep.subr.mxu0 0.0
    %490 = vmatpush1.msra.mxu0 %v364
    %491 = vmatprep.subr.mxu0 0.0
    %492 = vmatpush1.msra.mxu0 %v365
    %493 = vmatprep.subr.mxu0 0.0
    %494 = vmatpush1.msra.mxu0 %v366
    %495 = vmatprep.subr.mxu0 0.0
    %496 = vmatpush1.msra.mxu0 %v367
    %497 = vmatprep.subr.mxu0 0.0
    %498 = vmatpush1.msra.mxu0 %v368
    %499 = vmatprep.subr.mxu0 0.0
    %500 = vmatpush1.msra.mxu0 %v369
    %501 = vmatprep.subr.mxu0 0.0
    %502 = vmatpush1.msra.mxu0 %v370
    %503 = vmatprep.subr.mxu0 0.0
    %504 = vmatpush1.msra.mxu0 %v371
    %505 = vmatprep.subr.mxu0 0.0
    %506 = vmatpush1.msra.mxu0 %v372
    %507 = vmatprep.subr.mxu0 0.0
    %508 = vmatpush1.msra.mxu0 %v373
    %509 = vmatprep.subr.mxu0 0.0
    %510 = vmatpush1.msra.mxu0 %v374
    %511 = vmatprep.subr.mxu0 0.0
    %512 = vmatpush1.msra.mxu0 %v375
    %513 = vmatprep.subr.mxu0 0.0
    %514 = vmatpush1.msra.mxu0 %v376
    %515 = vmatprep.subr.mxu0 0.0
    %516 = vmatpush1.msra.mxu0 %v377
    %517 = vmatprep.subr.mxu0 0.0
    %518 = vmatpush1.msra.mxu0 %v378
    %519 = vmatprep.subr.mxu0 0.0
    %520 = vmatpush1.msra.mxu0 %v379
    %521 = vmatprep.mubr.f32.mxu0 %v315
    %522 = vmatmul.mubr.f32.gmra.mrb[0].mxu0 %v314
    %v523 = vpop.f32.mrb[0].mxu0
    %v524 = vadd.f32 %v454, %v523
    %v525 = vpop.f32.mrb[0].mxu0
    %526 = vdwg.mxu0
    %v527 = vadd.f32 %v524, %v83
    %v528 = vld [vmem:[#allocation8] sm:$0xff]
    %v529 = vld [vmem:[#allocation8 + $0x8] sm:$0xff]
    %v530 = vld [vmem:[#allocation8 + $0x10] sm:$0xff]
    %v531 = vld [vmem:[#allocation8 + $0x18] sm:$0xff]
    %v532 = vld [vmem:[#allocation8 + $0x20] sm:$0xff]
    %v533 = vld [vmem:[#allocation8 + $0x28] sm:$0xff]
    %v534 = vld [vmem:[#allocation8 + $0x30] sm:$0xff]
    %v535 = vld [vmem:[#allocation8 + $0x38] sm:$0xff]
    %v536 = vld [vmem:[#allocation8 + $0x40] sm:$0xff]
    %v537 = vld [vmem:[#allocation8 + $0x48] sm:$0xff]
    %v538 = vld [vmem:[#allocation8 + $0x50] sm:$0xff]
    %v539 = vld [vmem:[#allocation8 + $0x58] sm:$0xff]
    %v540 = vld [vmem:[#allocation8 + $0x60] sm:$0xff]
    %v541 = vld [vmem:[#allocation8 + $0x68] sm:$0xff]
    %v542 = vld [vmem:[#allocation8 + $0x70] sm:$0xff]
    %v543 = vld [vmem:[#allocation8 + $0x78] sm:$0xff]
    %544 = vmatprep.subr.mxu0 0.0
    %545 = vmatpush1.msra.mxu0 %v528
    %546 = vmatprep.subr.mxu0 0.0
    %547 = vmatpush1.msra.mxu0 %v529
    %548 = vmatprep.subr.mxu0 0.0
    %549 = vmatpush1.msra.mxu0 %v530
    %550 = vmatprep.subr.mxu0 0.0
    %551 = vmatpush1.msra.mxu0 %v531
    %552 = vmatprep.subr.mxu0 0.0
    %553 = vmatpush1.msra.mxu0 %v532
    %554 = vmatprep.subr.mxu0 0.0
    %555 = vmatpush1.msra.mxu0 %v533
    %556 = vmatprep.subr.mxu0 0.0
    %557 = vmatpush1.msra.mxu0 %v534
    %558 = vmatprep.subr.mxu0 0.0
    %559 = vmatpush1.msra.mxu0 %v535
    %560 = vmatprep.subr.mxu0 0.0
    %561 = vmatpush1.msra.mxu0 %v536
    %562 = vmatprep.subr.mxu0 0.0
    %563 = vmatpush1.msra.mxu0 %v537
    %564 = vmatprep.subr.mxu0 0.0
    %565 = vmatpush1.msra.mxu0 %v538
    %566 = vmatprep.subr.mxu0 0.0
    %567 = vmatpush1.msra.mxu0 %v539
    %568 = vmatprep.subr.mxu0 0.0
    %569 = vmatpush1.msra.mxu0 %v540
    %570 = vmatprep.subr.mxu0 0.0
    %571 = vmatpush1.msra.mxu0 %v541
    %572 = vmatprep.subr.mxu0 0.0
    %573 = vmatpush1.msra.mxu0 %v542
    %574 = vmatprep.subr.mxu0 0.0
    %575 = vmatpush1.msra.mxu0 %v543
    %576 = vmatprep.subr.mxu0 0.0
    %577 = vmatpush1.msra.mxu0 0.0
    %578 = vmatprep.subr.mxu0 0.0
    %579 = vmatpush1.msra.mxu0 0.0
    %580 = vmatprep.subr.mxu0 0.0
    %581 = vmatpush1.msra.mxu0 0.0
    %582 = vmatprep.subr.mxu0 0.0
    %583 = vmatpush1.msra.mxu0 0.0
    %584 = vmatprep.subr.mxu0 0.0
    %585 = vmatpush1.msra.mxu0 0.0
    %586 = vmatprep.subr.mxu0 0.0
    %587 = vmatpush1.msra.mxu0 0.0
    %588 = vmatprep.subr.mxu0 0.0
    %589 = vmatpush1.msra.mxu0 0.0
    %590 = vmatprep.subr.mxu0 0.0
    %591 = vmatpush1.msra.mxu0 0.0
    %592 = vmatprep.subr.mxu0 0.0
    %593 = vmatpush1.msra.mxu0 0.0
    %594 = vmatprep.subr.mxu0 0.0
    %595 = vmatpush1.msra.mxu0 0.0
    %596 = vmatprep.subr.mxu0 0.0
    %597 = vmatpush1.msra.mxu0 0.0
    %598 = vmatprep.subr.mxu0 0.0
    %599 = vmatpush1.msra.mxu0 0.0
    %600 = vmatprep.subr.mxu0 0.0
    %601 = vmatpush1.msra.mxu0 0.0
    %602 = vmatprep.subr.mxu0 0.0
    %603 = vmatpush1.msra.mxu0 0.0
    %604 = vmatprep.subr.mxu0 0.0
    %605 = vmatpush1.msra.mxu0 0.0
    %606 = vmatprep.subr.mxu0 0.0
    %607 = vmatpush1.msra.mxu0 0.0
    %608 = vmatprep.mubr.f32.mxu0 0.0
    %609 = vmatmul.mubr.f32.gmra.mrb[0].mxu0 %v527
    %v610 = vpop.f32.mrb[0].mxu0
    %v611 = vadd.f32 0.0, %v610
    %v612 = vpop.f32.mrb[0].mxu0
    %613 = vdwg.mxu0
    %v614 = vsub.f32 %v527, %v611
    %v615 = vmul.f32 %v614, %v614
    %616 = vmatprep.subr.mxu0 0.0
    %617 = vmatpush1.msra.mxu0 %v528
    %618 = vmatprep.subr.mxu0 0.0
    %619 = vmatpush1.msra.mxu0 %v529
    %620 = vmatprep.subr.mxu0 0.0
    %621 = vmatpush1.msra.mxu0 %v530
    %622 = vmatprep.subr.mxu0 0.0
    %623 = vmatpush1.msra.mxu0 %v531
    %624 = vmatprep.subr.mxu0 0.0
    %625 = vmatpush1.msra.mxu0 %v532
    %626 = vmatprep.subr.mxu0 0.0
    %627 = vmatpush1.msra.mxu0 %v533
    %628 = vmatprep.subr.mxu0 0.0
    %629 = vmatpush1.msra.mxu0 %v534
    %630 = vmatprep.subr.mxu0 0.0
    %631 = vmatpush1.msra.mxu0 %v535
    %632 = vmatprep.subr.mxu0 0.0
    %633 = vmatpush1.msra.mxu0 %v536
    %634 = vmatprep.subr.mxu0 0.0
    %635 = vmatpush1.msra.mxu0 %v537
    %636 = vmatprep.subr.mxu0 0.0
    %637 = vmatpush1.msra.mxu0 %v538
    %638 = vmatprep.subr.mxu0 0.0
    %639 = vmatpush1.msra.mxu0 %v539
    %640 = vmatprep.subr.mxu0 0.0
    %641 = vmatpush1.msra.mxu0 %v540
    %642 = vmatprep.subr.mxu0 0.0
    %643 = vmatpush1.msra.mxu0 %v541
    %644 = vmatprep.subr.mxu0 0.0
    %645 = vmatpush1.msra.mxu0 %v542
    %646 = vmatprep.subr.mxu0 0.0
    %647 = vmatpush1.msra.mxu0 %v543
    %648 = vmatprep.subr.mxu0 0.0
    %649 = vmatpush1.msra.mxu0 0.0
    %650 = vmatprep.subr.mxu0 0.0
    %651 = vmatpush1.msra.mxu0 0.0
    %652 = vmatprep.subr.mxu0 0.0
    %653 = vmatpush1.msra.mxu0 0.0
    %654 = vmatprep.subr.mxu0 0.0
    %655 = vmatpush1.msra.mxu0 0.0
    %656 = vmatprep.subr.mxu0 0.0
    %657 = vmatpush1.msra.mxu0 0.0
    %658 = vmatprep.subr.mxu0 0.0
    %659 = vmatpush1.msra.mxu0 0.0
    %660 = vmatprep.subr.mxu0 0.0
    %661 = vmatpush1.msra.mxu0 0.0
    %662 = vmatprep.subr.mxu0 0.0
    %663 = vmatpush1.msra.mxu0 0.0
    %664 = vmatprep.subr.mxu0 0.0
    %665 = vmatpush1.msra.mxu0 0.0
    %666 = vmatprep.subr.mxu0 0.0
    %667 = vmatpush1.msra.mxu0 0.0
    %668 = vmatprep.subr.mxu0 0.0
    %669 = vmatpush1.msra.mxu0 0.0
    %670 = vmatprep.subr.mxu0 0.0
    %671 = vmatpush1.msra.mxu0 0.0
    %672 = vmatprep.subr.mxu0 0.0
    %673 = vmatpush1.msra.mxu0 0.0
    %674 = vmatprep.subr.mxu0 0.0
    %675 = vmatpush1.msra.mxu0 0.0
    %676 = vmatprep.subr.mxu0 0.0
    %677 = vmatpush1.msra.mxu0 0.0
    %678 = vmatprep.subr.mxu0 0.0
    %679 = vmatpush1.msra.mxu0 0.0
    %680 = vmatprep.mubr.f32.mxu0 0.0
    %681 = vmatmul.mubr.f32.gmra.mrb[0].mxu0 %v615
    %v682 = vpop.f32.mrb[0].mxu0
    %v683 = vadd.f32 1e-05, %v682
    %v684 = vpop.f32.mrb[0].mxu0
    %685 = vdwg.mxu0
    %v686 = vrsqrt.pop %v683
    %v687 = vmul.f32 %v614, %v686
    %v688 = vld [vmem:[%s5] sm:$0x1]
    %v690 = vlaneseq
    %v691 = vshrl.u32 %v690, 7
    %v692 = vsub.s32 0, %v691
    %v693 = vrot.slane %v688, %v692
    %v695 = vmul.f32 %v687, %v693
    %v696 = vld [vmem:[%s6] sm:$0x1]
    %v698 = vlaneseq
    %v699 = vshrl.u32 %v698, 7
    %v700 = vsub.s32 0, %v699
    %v701 = vrot.slane %v696, %v700
    %v703 = vadd.f32 %v695, %v701
    %704 = vst [vmem:[#allocation10] sm:$0xff] %v703
    // Predicated region
    $region50: #{tpu_custom_call.1} parent=1 // pred_check
      _
    $region51: #{tpu_custom_call.1} parent=1 // pred_check_branch
      %706 = sbr.rel (0) target = $region53
    $region52: #{tpu_custom_call.1} parent=1 // pred_region
      %s708 = ssub.s32 128, 128
      %709 = vsyncadd [#allocation4], %s708
      %s711 = sshll.u32 [#allocation10], 4
      %s712 = int_to_ptr.vmem [resolvable:$true] %s711
      %714 = dma.vmem_to_hbm [thread:$0]  %s712, 128, %s8, [#allocation4]
    $region53: #{tpu_custom_call.1} parent=1 // pred_fallthru
      _
    // Predicated region
    $region54: #{tpu_custom_call.1} parent=1 // pred_check
      _
    $region55: #{tpu_custom_call.1} parent=1 // pred_check_branch
      %716 = sbr.rel (0) target = $region57
    $region56: #{tpu_custom_call.1} parent=1 // pred_region
      %717 = dma.done [#allocation4], 128
    $region57: #{tpu_custom_call.1} parent=1 // pred_fallthru
      _
    %718 = vsyncpa [#allocation3], 1
    %719 = vsyncpa [#allocation6], 1
    %720 = vsyncpa [#allocation9], 1
    %721 = vsyncpa [#allocation4], 1

</llo_original>
